<compile_context>
chip_gen: v7x
topology: tpu7x:2x2x1
jax: 0.10.0
libtpu: 0.0.40
codegen_flags: <defaults>
</compile_context>

<pallas_src>
import math
from functools import partial

import jax
import jax.numpy as jnp
from jax.experimental import pallas as pl
from jax.experimental.pallas import tpu as pltpu


def _round_up(x, m):
    return (x + m - 1) // m * m


def _fused_classifier_kernel(x_ref, w_ref, b_ref, o_ref):
    # In-kernel bf16 cast of the activation tile (VPU), then a single MXU matmul
    # with f32 accumulation.  Bias add stays f32 (v5e has no bf16 VPU path); one
    # cast at the lane-dense (tile_b, 128) bf16 store.
    x = x_ref[...].astype(jnp.bfloat16)
    acc = jnp.dot(x, w_ref[...], preferred_element_type=jnp.float32)
    o_ref[...] = (acc + b_ref[...]).astype(o_ref.dtype)


def prepare_classifier_params(w1, b1, w2, b2):
    """Once-per-parameter-set prep: fuse the two Linears and pad to 128 lanes.

    w1: (E, H); b1: (H,); w2: (H, C); b2: (C,)   (stored as (in, out): y = x @ W + b)
    Returns (w_p: (E, 128k) bf16, b_p: (1, 128k) f32, nclasses).
    """
    E, _ = w1.shape
    C = int(w2.shape[1])
    w1f = w1.astype(jnp.float32)
    w2f = w2.astype(jnp.float32)
    w_fused = w1f @ w2f                                               # (E, C)
    b_fused = b1.astype(jnp.float32) @ w2f + b2.astype(jnp.float32)   # (C,)

    C_pad = _round_up(max(C, 1), 128)
    w_p = jnp.zeros((E, C_pad), jnp.bfloat16).at[:, :C].set(w_fused.astype(jnp.bfloat16))
    b_p = jnp.zeros((1, C_pad), jnp.float32).at[:, :C].set(b_fused.reshape(1, C))
    return w_p, b_p, C


@partial(jax.jit, static_argnames=("nclasses", "tile_b"))
def sent_classifier_forward(x, w_p, b_p, *, nclasses, tile_b=1024):
    """Inference forward of SentClassifier on pre-fused, pre-padded params.

    x: (B, E) activations; w_p: (E, C_pad) bf16 fused weight; b_p: (1, C_pad) f32
    fused bias.  Returns (B, nclasses) logits in x.dtype.
    """
    B, E = x.shape
    C_pad = w_p.shape[1]
    out_dtype = x.dtype

    # ---- batch tile sizing: no input padding, cdiv grid handles partial blocks ----
    tile_b = _round_up(max(tile_b, 8), 8)          # f32 sublane multiple
    if B <= tile_b:
        if B > 128:
            # Split mid-size batches into >= 2 tiles so v7x's 2nd TensorCore is used.
            eff_tile = _round_up(pl.cdiv(B, 2), 8)
        else:
            # Single full-extent block; any B is legal when the block equals the dim.
            eff_tile = B
    else:
        eff_tile = tile_b
    grid_b = pl.cdiv(B, eff_tile)

    # Triple-buffer the streamed x tiles only when the grid is long; weight/bias
    # have constant index maps and stay resident, so default buffering is fine.
    x_spec_kwargs = {}
    if grid_b >= 3:
        x_spec_kwargs["pipeline_mode"] = pl.Buffered(3)
    x_spec = pl.BlockSpec((eff_tile, E), lambda i: (i, 0), **x_spec_kwargs)

    out = pl.pallas_call(
        _fused_classifier_kernel,
        # bf16 padded output: halves the dominant HBM write stream; real logits
        # are sliced (and cast back to the activation dtype) in the wrapper.
        out_shape=jax.ShapeDtypeStruct((B, C_pad), jnp.bfloat16),
        grid_spec=pltpu.PrefetchScalarGridSpec(
            num_scalar_prefetch=0,
            grid=(grid_b,),
            in_specs=[
                x_spec,                                        # streamed x tiles (f32)
                pl.BlockSpec((E, C_pad), lambda i: (0, 0)),    # fused W, resident bf16
                pl.BlockSpec((1, C_pad), lambda i: (0, 0)),    # fused bias, f32
            ],
            out_specs=pl.BlockSpec((eff_tile, C_pad), lambda i: (i, 0)),
        ),
        compiler_params=pltpu.CompilerParams(
            dimension_semantics=("parallel",),  # batch tiles shard over v7x's 2 TCs
        ),
    )(x, w_p, b_p)

    return out[:B, :nclasses].astype(out_dtype)


def init_params(key, emb_size, nhid, nclasses, dtype=jnp.float32):
    """Deterministic init mimicking torch.nn.Linear defaults (uniform +/- 1/sqrt(fan_in))."""
    k1, k2, k3, k4 = jax.random.split(key, 4)
    bound1 = 1.0 / math.sqrt(emb_size)
    bound2 = 1.0 / math.sqrt(nhid)
    # Stored as (in, out) so the math is x @ W + b.
    w1 = jax.random.uniform(k1, (emb_size, nhid), dtype, -bound1, bound1)
    b1 = jax.random.uniform(k2, (nhid,), dtype, -bound1, bound1)
    w2 = jax.random.uniform(k3, (nhid, nclasses), dtype, -bound2, bound2)
    b2 = jax.random.uniform(k4, (nclasses,), dtype, -bound2, bound2)
    return w1, b1, w2, b2


def reference_forward(x, w1, b1, w2, b2):
    hid = x @ w1 + b1          # dropout == identity at inference
    return hid @ w2 + b2


if __name__ == "__main__":
    # Shapes implied by HAN: doc_emb size = lstm_hidden*2 (bidirectional GRU) = 64,
    # classifier hidden = mlp_nhid = 32, nclass = 4.  Batch intentionally not a
    # multiple of 8 to exercise the full-extent-block path.
    B, E, H, C = 10, 64, 32, 4

    key = jax.random.PRNGKey(0)
    kx, kp, kx2 = jax.random.split(key, 3)
    x = jax.random.normal(kx, (B, E), jnp.float32)
    w1, b1, w2, b2 = init_params(kp, E, H, C)

    # Per-parameter-set prep hoisted out of the per-call path (review item #5).
    w_p, b_p, nclasses = prepare_classifier_params(w1, b1, w2, b2)

    # 1) Small batch, single full-extent block.
    out = jax.block_until_ready(sent_classifier_forward(x, w_p, b_p, nclasses=nclasses))
    ref = reference_forward(x, w1, b1, w2, b2)
    assert out.shape == (B, C) and out.dtype == x.dtype
    assert jnp.allclose(out, ref, atol=2e-2, rtol=2e-2), "mismatch vs reference (small batch)"

    # 2) Multi-tile path: 3 tiles with a partial last block; exercises Buffered(3)
    #    on the streamed x spec and the masked partial-block writeback.
    B2 = 300
    x2 = jax.random.normal(kx2, (B2, E), jnp.float32)
    out2 = jax.block_until_ready(
        sent_classifier_forward(x2, w_p, b_p, nclasses=nclasses, tile_b=128))
    ref2 = reference_forward(x2, w1, b1, w2, b2)
    assert out2.shape == (B2, C)
    assert jnp.allclose(out2, ref2, atol=2e-2, rtol=2e-2), "mismatch vs reference (multi-tile)"

    # 3) Default tile: mid-size batch is split into exactly 2 tiles so both v7x
    #    TensorCores get a tile (grid=(2,), partial last block).
    out3 = jax.block_until_ready(
        sent_classifier_forward(x2, w_p, b_p, nclasses=nclasses))
    assert out3.shape == (B2, C)
    assert jnp.allclose(out3, ref2, atol=2e-2, rtol=2e-2), "mismatch vs reference (2-tile split)"

    print("KERNEL_OK")
</pallas_src>

<mosaic_0001>
module attributes {stable_mosaic.version = 11 : i64} {
  func.func @_fused_classifier_kernel(%arg0: i32, %arg1: memref<10x64xf32, #tpu.memory_space<vmem>>, %arg2: memref<64x128xbf16, #tpu.memory_space<vmem>>, %arg3: memref<1x128xf32, #tpu.memory_space<vmem>>, %arg4: memref<10x128xbf16, #tpu.memory_space<vmem>>) attributes {dimension_semantics = [#tpu.dimension_semantics<parallel>], iteration_bounds = array<i64: 1>, scalar_prefetch = 0 : i64, scratch_operands = 0 : i64, tpu.core_type = #tpu.core_type<tc>, window_params = [{transform_indices = @transform_0, window_bounds = array<i64: 10, 64>}, {pipeline_mode = #tpu.pipeline_mode<synchronous>, transform_indices = @transform_1, window_bounds = array<i64: 64, 128>}, {pipeline_mode = #tpu.pipeline_mode<synchronous>, transform_indices = @transform_2, window_bounds = array<i64: 1, 128>}, {transform_indices = @transform_3, window_bounds = array<i64: 10, 128>}]} {
    %c0 = arith.constant 0 : index
    %c0_0 = arith.constant 0 : index
    %0 = vector.load %arg1[%c0, %c0_0] : memref<10x64xf32, #tpu.memory_space<vmem>>, vector<10x64xf32>
    %1 = arith.truncf %0 : vector<10x64xf32> to vector<10x64xbf16>
    %c0_1 = arith.constant 0 : index
    %c0_2 = arith.constant 0 : index
    %2 = vector.load %arg2[%c0_1, %c0_2] : memref<64x128xbf16, #tpu.memory_space<vmem>>, vector<64x128xbf16>
    %cst = arith.constant dense<0.000000e+00> : vector<10x128xf32>
    %3 = tpu.matmul %1, %2, %cst {dimension_numbers = #tpu.dot_dimension_numbers<[1], [0], [0], [1], [0, 0, 1, 1], [], []>} : vector<10x64xbf16>, vector<64x128xbf16>, vector<10x128xf32> -> vector<10x128xf32>
    %c0_3 = arith.constant 0 : index
    %c0_4 = arith.constant 0 : index
    %4 = vector.load %arg3[%c0_3, %c0_4] : memref<1x128xf32, #tpu.memory_space<vmem>>, vector<1x128xf32>
    %5 = vector.broadcast %4 : vector<1x128xf32> to vector<10x128xf32>
    %6 = arith.addf %3, %5 : vector<10x128xf32>
    %7 = arith.truncf %6 : vector<10x128xf32> to vector<10x128xbf16>
    %c0_5 = arith.constant 0 : index
    %c0_6 = arith.constant 0 : index
    %8 = vector.load %arg4[%c0_5, %c0_6] : memref<10x128xbf16, #tpu.memory_space<vmem>>, vector<10x128xbf16>
    tpu.vector_store %arg4[%c0_5, %c0_6], %7 {strides = array<i32>} : memref<10x128xbf16, #tpu.memory_space<vmem>>, vector<10x128xbf16>,
    return
  }
  func.func @transform_0(%arg0: i32) -> (i32, i32) {
    %c0_i32 = arith.constant 0 : i32
    %c0_i32_0 = arith.constant 0 : i32
    return %arg0, %c0_i32 : i32, i32
  }
  func.func @transform_1(%arg0: i32) -> (i32, i32) {
    %c0_i32 = arith.constant 0 : i32
    %c0_i32_0 = arith.constant 0 : i32
    %c0_i32_1 = arith.constant 0 : i32
    return %c0_i32, %c0_i32_0 : i32, i32
  }
  func.func @transform_2(%arg0: i32) -> (i32, i32) {
    %c0_i32 = arith.constant 0 : i32
    %c0_i32_0 = arith.constant 0 : i32
    %c0_i32_1 = arith.constant 0 : i32
    return %c0_i32, %c0_i32_0 : i32, i32
  }
  func.func @transform_3(%arg0: i32) -> (i32, i32) {
    %c0_i32 = arith.constant 0 : i32
    %c0_i32_0 = arith.constant 0 : i32
    return %arg0, %c0_i32 : i32, i32
  }
}

</mosaic_0001>

<llo_original>
// kernel: sent_classifier_forward.1
$region0: #{sent_classifier_forward.1}
  #allocation0 [shape = 'u32[]', space=smem, size = 0x4, offset = 0x4, fixed_abs, tag = 'smem constant byte address 0x4 - core index']
  #allocation1 [shape = 'u32[144,128]{1,0:T(1,128)}', space=vmem, size = 0x12000, scoped, tag = 'internal scratch']
  %s0 = inlined_call_operand.hbm [shape: f32[10,64], index: 0, kind: input, shape index: {}]
  %s1 = inlined_call_operand.hbm [shape: bf16[64,128], index: 1, kind: input, shape index: {}]
  %s2 = inlined_call_operand.vmem [shape: f32[1,128], index: 2, kind: input, shape index: {}]
  %s3 = inlined_call_operand.vmem [shape: bf16[10,128], index: 3, kind: output, shape index: {}]
  %s4 = sld [smem:[#allocation0]]
  $region30: #{sent_classifier_forward.1} parent=0
    _
  %s6 = ssub.s32 1, %s4
  %s7 = scalar_select 0, %s6, %s4
  $region1: #{sent_classifier_forward.1} parent=0
    #allocation2 [shape = 'u8[8192]{0}', space=vmem, size = 0x2000, scoped, tag = 'input window, operand 0, single buffered']
    #allocation3 [shape = 's32[1]{0}', space=sflag, size = 0x4, scoped, tag = 'scoped memory for sent_classifier_forward.1']
    #allocation4 [shape = 'u8[16384]{0}', space=vmem, size = 0x4000, scoped, tag = 'input window, operand 1, single buffered']
    #allocation5 [shape = 's32[1]{0}', space=sflag, size = 0x4, scoped, tag = 'scoped memory for sent_classifier_forward.1']
    %8 = vsyncpa [#allocation3], 0
    %9 = vsyncpa [#allocation5], 0
    // Predicated region
    $region2: #{sent_classifier_forward.1} parent=1 // pred_check
      _
    $region3: #{sent_classifier_forward.1} parent=1 // pred_check_branch
      %11 = sbr.rel (0) target = $region5
    $region4: #{sent_classifier_forward.1} parent=1 // pred_region
      %s13 = ssub.s32 256, 256
      %14 = vsyncadd [#allocation3], %s13
      %s15 = sshll.u32 [#allocation2], 4
      %s16 = int_to_ptr.vmem [resolvable:$true] %s15
      %21 = dma.hbm_to_vmem [thread:$0]  %s0, 256, %s16, [#allocation3], 128, 128, 8
    $region5: #{sent_classifier_forward.1} parent=1 // pred_fallthru
      _
    // Predicated region
    $region6: #{sent_classifier_forward.1} parent=1 // pred_check
      _
    $region7: #{sent_classifier_forward.1} parent=1 // pred_check_branch
      %23 = sbr.rel (0) target = $region9
    $region8: #{sent_classifier_forward.1} parent=1 // pred_region
      %s25 = ssub.s32 512, 512
      %26 = vsyncadd [#allocation5], %s25
      %s27 = sshll.u32 [#allocation4], 4
      %s28 = int_to_ptr.vmem [resolvable:$true] %s27
      %33 = dma.hbm_to_vmem [thread:$0]  %s1, 512, %s28, [#allocation5], 64, 64, 4
    $region9: #{sent_classifier_forward.1} parent=1 // pred_fallthru
      _
    // Predicated region
    $region10: #{sent_classifier_forward.1} parent=1 // pred_check
      _
    $region11: #{sent_classifier_forward.1} parent=1 // pred_check_branch
      %35 = sbr.rel (0) target = $region13
    $region12: #{sent_classifier_forward.1} parent=1 // pred_region
      _
    $region13: #{sent_classifier_forward.1} parent=1 // pred_fallthru
      _
    // Predicated region
    $region14: #{sent_classifier_forward.1} parent=1 // pred_check
      _
    $region15: #{sent_classifier_forward.1} parent=1 // pred_check_branch
      %37 = sbr.rel (0) target = $region17
    $region16: #{sent_classifier_forward.1} parent=1 // pred_region
      %38 = dma.done [#allocation3], 256
    $region17: #{sent_classifier_forward.1} parent=1 // pred_fallthru
      _
    // Predicated region
    $region18: #{sent_classifier_forward.1} parent=1 // pred_check
      _
    $region19: #{sent_classifier_forward.1} parent=1 // pred_check_branch
      %40 = sbr.rel (0) target = $region21
    $region20: #{sent_classifier_forward.1} parent=1 // pred_region
      %41 = dma.done [#allocation5], 512
    $region21: #{sent_classifier_forward.1} parent=1 // pred_fallthru
      _
    %v43 = vld [vmem:[#allocation2] sm:$0xff]
    %v44 = vld [vmem:[#allocation2 + $0x8] sm:$0x3]
    %v45 = vpack.c.bf16 %v44, %v43
    %v46 = vld [vmem:[#allocation4] sm:$0xf]
    %v47 = vld [vmem:[#allocation4 + $0x4] sm:$0xf]
    %v48 = vld [vmem:[#allocation4 + $0x8] sm:$0xf]
    %v49 = vld [vmem:[#allocation4 + $0xc] sm:$0xf]
    %v50 = vld [vmem:[#allocation4 + $0x10] sm:$0xf]
    %v51 = vld [vmem:[#allocation4 + $0x14] sm:$0xf]
    %v52 = vld [vmem:[#allocation4 + $0x18] sm:$0xf]
    %v53 = vld [vmem:[#allocation4 + $0x1c] sm:$0xf]
    %v54 = vld [vmem:[%s2] sm:$0x1]
    %v56 = vlaneseq
    %v57 = vshrl.u32 %v56, 7
    %v58 = vsub.s32 0, %v57
    %v59 = vrot.slane %v54, %v58
    %v69 = vunpack.c.l.b16 %v46
    %v70 = vunpack.c.l.b16 %v47
    %v71 = vunpack.c.l.b16 %v48
    %v72 = vunpack.c.l.b16 %v49
    %v73 = vunpack.c.l.b16 %v50
    %v74 = vunpack.c.l.b16 %v51
    %v75 = vunpack.c.l.b16 %v52
    %v76 = vunpack.c.l.b16 %v53
    %v77 = vpack.c.b16 %v70, %v69
    %v78 = vpack.c.b16 %v72, %v71
    %v79 = vpack.c.b16 %v74, %v73
    %v80 = vpack.c.b16 %v76, %v75
    %vm85 = vcmask 523264
    %v87 = vsel %vm85, %v45, 0
    %89 = vmatprep.subr.bf16.mxu0 0
    %90 = vmatpush1.bf16.msra.mxu0 %v77
    %91 = vmatprep.subr.bf16.mxu0 0
    %92 = vmatpush1.bf16.msra.mxu0 %v78
    %93 = vmatprep.subr.bf16.mxu0 0
    %94 = vmatpush1.bf16.msra.mxu0 %v79
    %95 = vmatprep.subr.bf16.mxu0 0
    %96 = vmatpush1.bf16.msra.mxu0 %v80
    %97 = vmatprep.subr.bf16.mxu0 0
    %98 = vmatpush1.bf16.msra.mxu0 0
    %99 = vmatprep.subr.bf16.mxu0 0
    %100 = vmatpush1.bf16.msra.mxu0 0
    %101 = vmatprep.subr.bf16.mxu0 0
    %102 = vmatpush1.bf16.msra.mxu0 0
    %103 = vmatprep.subr.bf16.mxu0 0
    %104 = vmatpush1.bf16.msra.mxu0 0
    %105 = vmatprep.subr.bf16.mxu0 0
    %106 = vmatpush1.bf16.msra.mxu0 0
    %107 = vmatprep.subr.bf16.mxu0 0
    %108 = vmatpush1.bf16.msra.mxu0 0
    %109 = vmatprep.subr.bf16.mxu0 0
    %110 = vmatpush1.bf16.msra.mxu0 0
    %111 = vmatprep.subr.bf16.mxu0 0
    %112 = vmatpush1.bf16.msra.mxu0 0
    %113 = vmatprep.subr.bf16.mxu0 0
    %114 = vmatpush1.bf16.msra.mxu0 0
    %115 = vmatprep.subr.bf16.mxu0 0
    %116 = vmatpush1.bf16.msra.mxu0 0
    %117 = vmatprep.subr.bf16.mxu0 0
    %118 = vmatpush1.bf16.msra.mxu0 0
    %119 = vmatprep.subr.bf16.mxu0 0
    %120 = vmatpush1.bf16.msra.mxu0 0
    %121 = vmatprep.mubr.bf16.mxu0 0
    %122 = vmatmul.mubr.bf16.gmra.mrb[0].mxu0 %v87
    %v123 = vpop.f32.mrb[0].mxu0
    %v124 = vadd.f32 %v59, %v123
    %v125 = vpop.f32.mrb[0].mxu0
    %v126 = vpop.f32.mrb[0].mxu0
    %v127 = vadd.f32 %v59, %v126
    %v128 = vpop.f32.mrb[0].mxu0
    %129 = vdwg.mxu0
    %v130 = vpack.c.bf16 %v127, %v124
    %v132 = vunpack.c.l.b16 %v130
    %v133 = vunpack.c.h.b16 %v130
    %v134 = vpack.c.b16 %v132, %v132
    %v135 = vpack.c.b16 %v133, %v133
    %138 = vst [vmem:[%s3] sm:$0xf] %v134
    %139 = vst [vmem:[%s3 + $0x4] sm:$0x1] %v135
    // Predicated region
    $region22: #{sent_classifier_forward.1} parent=1 // pred_check
      _
    $region23: #{sent_classifier_forward.1} parent=1 // pred_check_branch
      %141 = sbr.rel (0) target = $region25
    $region24: #{sent_classifier_forward.1} parent=1 // pred_region
      _
    $region25: #{sent_classifier_forward.1} parent=1 // pred_fallthru
      _
    // Predicated region
    $region26: #{sent_classifier_forward.1} parent=1 // pred_check
      _
    $region27: #{sent_classifier_forward.1} parent=1 // pred_check_branch
      %143 = sbr.rel (0) target = $region29
    $region28: #{sent_classifier_forward.1} parent=1 // pred_region
      _
    $region29: #{sent_classifier_forward.1} parent=1 // pred_fallthru
      _
    %144 = vsyncpa [#allocation3], 1
    %145 = vsyncpa [#allocation5], 1

</llo_original>
